<compile_context>
chip_gen: v7x
topology: tpu7x:2x2x1
jax: 0.10.0
libtpu: 0.0.40
codegen_flags: <defaults>
</compile_context>

<pallas_src>
import jax
import jax.numpy as jnp
from jax.experimental import pallas as pl
from jax.experimental.pallas import tpu as pltpu


def _round_up(x, m):
    return ((x + m - 1) // m) * m


# ---------------------------------------------------------------------------
# Kernels
# ---------------------------------------------------------------------------
def _gelu_tanh(h):
    # 0.5*h*(1 + tanh(sqrt(2/pi)*(h + 0.044715*h^3))) — same factorization as
    # the PyTorch GELU module; tanh goes to the EUP, h*h reuse saves a VALU mul.
    c = jnp.float32(0.7978845608028654)  # sqrt(2/pi)
    return 0.5 * h * (1.0 + jnp.tanh(c * h * (1.0 + 0.044715 * h * h)))


def _ffn_kernel_acc_in_out(x_ref, w1_ref, b1_ref, w2_ref, b2_ref, o_ref):
    """f32-output path: accumulate directly into the resident output tile."""
    h_idx = pl.program_id(1)

    @pl.when(h_idx == 0)
    def _():
        o_ref[...] = jnp.zeros_like(o_ref)

    h = jnp.dot(x_ref[...], w1_ref[...],
                preferred_element_type=jnp.float32) + b1_ref[...]
    g = _gelu_tanh(h)
    o_ref[...] += jnp.dot(g.astype(w2_ref.dtype), w2_ref[...],
                          preferred_element_type=jnp.float32)

    @pl.when(h_idx == pl.num_programs(1) - 1)
    def _():
        o_ref[...] += b2_ref[...]


def _ffn_kernel_scratch(x_ref, w1_ref, b1_ref, w2_ref, b2_ref, o_ref, acc_ref):
    """Narrow-output path (bf16 out, etc.): accumulate in an f32 VMEM scratch."""
    h_idx = pl.program_id(1)

    @pl.when(h_idx == 0)
    def _():
        acc_ref[...] = jnp.zeros_like(acc_ref)

    h = jnp.dot(x_ref[...], w1_ref[...],
                preferred_element_type=jnp.float32) + b1_ref[...]
    g = _gelu_tanh(h)
    acc_ref[...] += jnp.dot(g.astype(w2_ref.dtype), w2_ref[...],
                            preferred_element_type=jnp.float32)

    @pl.when(h_idx == pl.num_programs(1) - 1)
    def _():
        o_ref[...] = (acc_ref[...] + b2_ref[...]).astype(o_ref.dtype)


# ---------------------------------------------------------------------------
# Tile-size helpers
# ---------------------------------------------------------------------------
def _pick_th(H, th_req):
    """Largest multiple of 128 <= th_req that divides H; else full H."""
    th = min(th_req, H)
    if th == H or (th % 128 == 0 and H % th == 0):
        return th
    d = (th // 128) * 128
    while d >= 128:
        if H % d == 0:
            return d
        d -= 128
    # TODO(synk): pad H / masked last slab for pathological hidden sizes with
    # no multiple-of-128 divisor instead of falling back to a full-H slab.
    return H


def _next_smaller_th(H, th):
    d = ((th - 1) // 128) * 128
    while d >= 128:
        if H % d == 0:
            return d
        d -= 128
    return th


# ---------------------------------------------------------------------------
# Wrapper
# ---------------------------------------------------------------------------
def feedforward_pallas(x, w1, b1, w2, b2, *, tm=None, th=512,
                       mxu_dtype=jnp.bfloat16, weight_buffers=2):
    """x: (B, T, E); w1: (E, H); b1: (H,); w2: (H, E); b2: (E,). Returns (B, T, E).

    mxu_dtype: matmul operand dtype (default bf16; accumulation and GELU stay
    f32).  Pass None for the exact all-f32 path.  Weights already in mxu_dtype
    are not re-cast — cast them once at model load.
    weight_buffers: pipeline depth for the W1/W2 slabs (3 can help on v5e).
    """
    B, T, E = x.shape
    H = w1.shape[1]
    M = B * T
    out_dtype = x.dtype

    # --- hardware query ----------------------------------------------------
    try:
        vmem_cap = int(pltpu.get_tpu_info().vmem_capacity_bytes)
    except Exception:
        vmem_cap = 64 << 20                        # conservative (v7x-sized)
    vmem_budget = min(int(vmem_cap * 0.875), 100 << 20)   # ~56 MiB on v7x

    # --- operand dtype prep --------------------------------------------------
    x2 = x.reshape(M, E)
    if mxu_dtype is not None:
        if x2.dtype != mxu_dtype:
            x2 = x2.astype(mxu_dtype)
        if w1.dtype != mxu_dtype:          # prefer pre-cast weights at load time
            w1 = w1.astype(mxu_dtype)
        if w2.dtype != mxu_dtype:
            w2 = w2.astype(mxu_dtype)

    Ep = _round_up(E, 128)                 # lane-dense stores (avoid vst.msk)

    # --- tile sizing ---------------------------------------------------------
    if tm is None:
        tm = 512 if vmem_cap <= (64 << 20) else 768   # v7x vs v5e/v6e
    tm = max(8, min(tm, _round_up(M, 8)))
    if M >= 512 and _round_up(M, tm) // tm < 2:
        tm = _round_up((M + 1) // 2, 8)    # >=2 row tiles for v7x's 2 TCs
    Mp = _round_up(M, tm)

    th = _pick_th(H, th)

    in_it = jnp.dtype(x2.dtype).itemsize
    w1_it = jnp.dtype(w1.dtype).itemsize
    w2_it = jnp.dtype(w2.dtype).itemsize
    o_it = jnp.dtype(out_dtype).itemsize
    use_scratch = out_dtype != jnp.float32
    wb = max(2, int(weight_buffers))

    def _footprint(tm_, th_):
        f = (2 * tm_ * Ep * in_it           # x tile (double-buffered)
             + wb * Ep * th_ * w1_it        # W1 hidden slab
             + wb * th_ * Ep * w2_it        # W2 hidden slab
             + 2 * th_ * 4 + 2 * Ep * 4     # bias slabs
             + 2 * tm_ * Ep * o_it)         # output tile
        if use_scratch:
            f += tm_ * Ep * 4               # f32 accumulator scratch
        return f

    # Auto-shrink tiles until the double-buffered footprint fits the budget.
    while _footprint(tm, th) > vmem_budget:
        nth = _next_smaller_th(H, th)
        if nth < th:
            th = nth
            continue
        if tm > 64:
            tm = max(64, _round_up(tm // 2, 8))
            Mp = _round_up(M, tm)
            continue
        break

    n_h = H // th
    n_m = Mp // tm

    # --- padding -------------------------------------------------------------
    if Mp != M or Ep != E:
        x2 = jnp.pad(x2, ((0, Mp - M), (0, Ep - E)))
    if Ep != E:
        w1 = jnp.pad(w1, ((0, Ep - E), (0, 0)))
        w2 = jnp.pad(w2, ((0, 0), (0, Ep - E)))

    b1_2d = b1.reshape(1, H).astype(jnp.float32)
    b2_2d = b2.reshape(1, E).astype(jnp.float32)
    if Ep != E:
        b2_2d = jnp.pad(b2_2d, ((0, 0), (0, Ep - E)))

    # --- compiler params / cost estimate -------------------------------------
    vmem_est = _footprint(tm, th)
    compiler_params = pltpu.CompilerParams(
        dimension_semantics=("parallel", "arbitrary"),
        vmem_limit_bytes=int(min(max(int(vmem_est * 1.25), 32 << 20),
                                 vmem_budget)),
    )

    cost = pl.CostEstimate(
        flops=2 * Mp * Ep * H * 2,                 # two matmuls
        transcendentals=Mp * H,                    # one tanh per hidden act
        bytes_accessed=(Mp * Ep * in_it
                        + n_m * (Ep * H * w1_it + H * Ep * w2_it)  # re-streamed
                        + H * 4 + Ep * 4
                        + Mp * Ep * o_it),
    )

    w_spec_kwargs = {}
    if wb != 2:
        # v5e knob: deeper weight-slab buffering if weight DMA is exposed.
        w_spec_kwargs = dict(pipeline_mode=pl.Buffered(wb))

    in_specs = [
        pl.BlockSpec((tm, Ep), lambda i, h: (i, 0)),                   # x rows
        pl.BlockSpec((Ep, th), lambda i, h: (0, h), **w_spec_kwargs),  # W1 slab
        pl.BlockSpec((1, th), lambda i, h: (0, h)),                    # b1 slab
        pl.BlockSpec((th, Ep), lambda i, h: (h, 0), **w_spec_kwargs),  # W2 slab
        pl.BlockSpec((1, Ep), lambda i, h: (0, 0)),                    # b2
    ]
    out_spec = pl.BlockSpec((tm, Ep), lambda i, h: (i, 0))

    kernel = _ffn_kernel_scratch if use_scratch else _ffn_kernel_acc_in_out
    scratch = [pltpu.VMEM((tm, Ep), jnp.float32)] if use_scratch else []

    out2 = pl.pallas_call(
        kernel,
        out_shape=jax.ShapeDtypeStruct((Mp, Ep), out_dtype),
        grid_spec=pltpu.PrefetchScalarGridSpec(
            num_scalar_prefetch=0,
            grid=(n_m, n_h),
            in_specs=in_specs,
            out_specs=out_spec,
            scratch_shapes=scratch,
        ),
        compiler_params=compiler_params,
        cost_estimate=cost,
    )(x2, w1, b1_2d, w2, b2_2d)

    return out2[:M, :E].reshape(B, T, E)


# ---------------------------------------------------------------------------
# Reference / test harness
# ---------------------------------------------------------------------------
def feedforward_ref(x, w1, b1, w2, b2):
    h = x @ w1 + b1
    c = jnp.sqrt(2.0 / jnp.pi)
    g = 0.5 * h * (1.0 + jnp.tanh(c * (h + 0.044715 * h ** 3)))
    return g @ w2 + b2


def _make_params(key, emb, hidden, dtype=jnp.float32):
    kw1, kb1, kw2, kb2 = jax.random.split(key, 4)
    w1 = jax.random.normal(kw1, (emb, hidden), dtype=dtype) * 0.02
    b1 = jax.random.normal(kb1, (hidden,), dtype=dtype) * 0.02
    w2 = jax.random.normal(kw2, (hidden, emb), dtype=dtype) * 0.02
    b2 = jax.random.normal(kb2, (emb,), dtype=dtype) * 0.02
    return w1, b1, w2, b2


if __name__ == "__main__":
    key = jax.random.PRNGKey(0)
    k1, k2, k3, k4, k5 = jax.random.split(key, 5)

    # Case 1: exact f32 MXU path, module-spec shapes (emb_dim=32 -> hidden=128).
    batch, seq, emb = 2, 8, 32
    hidden = 4 * emb
    x = jax.random.normal(k1, (batch, seq, emb), dtype=jnp.float32)
    w1, b1, w2, b2 = _make_params(k2, emb, hidden)

    out = feedforward_pallas(x, w1, b1, w2, b2, mxu_dtype=None)
    out = jax.block_until_ready(out)
    ref = feedforward_ref(x, w1, b1, w2, b2)
    assert out.shape == (batch, seq, emb)
    assert jnp.allclose(out, ref, atol=1e-5, rtol=1e-5), "case 1 mismatch (f32 path)"

    # Case 2: default bf16 MXU path, ragged M, hidden tiling, pre-cast weights.
    batch2, seq2, emb2 = 3, 37, 64
    hidden2 = 4 * emb2
    x2 = jax.random.normal(k3, (batch2, seq2, emb2), dtype=jnp.float32)
    w1f, b1f, w2f, b2f = _make_params(k4, emb2, hidden2)
    w1b = w1f.astype(jnp.bfloat16)          # cast ONCE, "model load" style
    w2b = w2f.astype(jnp.bfloat16)

    out2 = feedforward_pallas(x2, w1b, b1f, w2b, b2f, tm=256, th=128)
    out2 = jax.block_until_ready(out2)
    ref2 = feedforward_ref(x2, w1f, b1f, w2f, b2f)
    assert out2.shape == (batch2, seq2, emb2)
    assert jnp.allclose(out2, ref2, atol=5e-3, rtol=5e-2), "case 2 mismatch (bf16 path)"

    # Case 3: bf16 activations in/out (scratch-accumulator epilogue path).
    x3 = jax.random.normal(k5, (2, 16, 32), dtype=jnp.bfloat16)
    out3 = feedforward_pallas(
        x3, w1.astype(jnp.bfloat16), b1, w2.astype(jnp.bfloat16), b2)
    out3 = jax.block_until_ready(out3)
    ref3 = feedforward_ref(x3.astype(jnp.float32), w1, b1, w2, b2)
    assert out3.dtype == jnp.bfloat16 and out3.shape == (2, 16, 32)
    assert jnp.allclose(out3.astype(jnp.float32), ref3, atol=1e-2, rtol=1e-1), \
        "case 3 mismatch (bf16 output path)"

    print("KERNEL_OK")
</pallas_src>

<mosaic_0001>
module attributes {stable_mosaic.version = 11 : i64} {
  func.func @_ffn_kernel_acc_in_out(%arg0: i32, %arg1: i32, %arg2: memref<16x128xf32, #tpu.memory_space<vmem>>, %arg3: memref<128x128xf32, #tpu.memory_space<vmem>>, %arg4: memref<1x128xf32, #tpu.memory_space<vmem>>, %arg5: memref<128x128xf32, #tpu.memory_space<vmem>>, %arg6: memref<1x128xf32, #tpu.memory_space<vmem>>, %arg7: memref<16x128xf32, #tpu.memory_space<vmem>>) attributes {dimension_semantics = [#tpu.dimension_semantics<parallel>, #tpu.dimension_semantics<arbitrary>], iteration_bounds = array<i64: 1, 1>, scalar_prefetch = 0 : i64, scratch_operands = 0 : i64, tpu.core_type = #tpu.core_type<tc>, window_params = [{transform_indices = @transform_0, window_bounds = array<i64: 16, 128>}, {transform_indices = @transform_1, window_bounds = array<i64: 128, 128>}, {transform_indices = @transform_2, window_bounds = array<i64: 1, 128>}, {transform_indices = @transform_3, window_bounds = array<i64: 128, 128>}, {pipeline_mode = #tpu.pipeline_mode<synchronous>, transform_indices = @transform_4, window_bounds = array<i64: 1, 128>}, {transform_indices = @transform_5, window_bounds = array<i64: 16, 128>}]} {
    %c0_i32 = arith.constant 0 : i32
    %0 = arith.cmpi eq, %arg1, %c0_i32 : i32
    %1 = arith.extui %0 : i1 to i32
    %c0_i32_0 = arith.constant 0 : i32
    %2 = arith.cmpi ne, %1, %c0_i32_0 : i32
    scf.if %2 {
      %cst_20 = arith.constant 0.000000e+00 : f32
      %31 = vector.broadcast %cst_20 : f32 to vector<16x128xf32>
      %c0_21 = arith.constant 0 : index
      %c0_22 = arith.constant 0 : index
      %32 = vector.load %arg7[%c0_21, %c0_22] : memref<16x128xf32, #tpu.memory_space<vmem>>, vector<16x128xf32>
      tpu.vector_store %arg7[%c0_21, %c0_22], %31 {strides = array<i32>} : memref<16x128xf32, #tpu.memory_space<vmem>>, vector<16x128xf32>,
    } else {
    }
    %c0 = arith.constant 0 : index
    %c0_1 = arith.constant 0 : index
    %3 = vector.load %arg2[%c0, %c0_1] : memref<16x128xf32, #tpu.memory_space<vmem>>, vector<16x128xf32>
    %c0_2 = arith.constant 0 : index
    %c0_3 = arith.constant 0 : index
    %4 = vector.load %arg3[%c0_2, %c0_3] : memref<128x128xf32, #tpu.memory_space<vmem>>, vector<128x128xf32>
    %cst = arith.constant dense<0.000000e+00> : vector<16x128xf32>
    %5 = tpu.matmul %3, %4, %cst {dimension_numbers = #tpu.dot_dimension_numbers<[1], [0], [0], [1], [0, 0, 1, 1], [], []>} : vector<16x128xf32>, vector<128x128xf32>, vector<16x128xf32> -> vector<16x128xf32>
    %c0_4 = arith.constant 0 : index
    %c0_5 = arith.constant 0 : index
    %6 = vector.load %arg4[%c0_4, %c0_5] : memref<1x128xf32, #tpu.memory_space<vmem>>, vector<1x128xf32>
    %7 = vector.broadcast %6 : vector<1x128xf32> to vector<16x128xf32>
    %8 = arith.addf %5, %7 : vector<16x128xf32>
    %cst_6 = arith.constant 5.000000e-01 : f32
    %9 = vector.broadcast %cst_6 : f32 to vector<16x128xf32>
    %10 = arith.mulf %9, %8 : vector<16x128xf32>
    %cst_7 = arith.constant 0.797884583 : f32
    %11 = vector.broadcast %cst_7 : f32 to vector<16x128xf32>
    %12 = arith.mulf %11, %8 : vector<16x128xf32>
    %cst_8 = arith.constant 4.471500e-02 : f32
    %13 = vector.broadcast %cst_8 : f32 to vector<16x128xf32>
    %14 = arith.mulf %13, %8 : vector<16x128xf32>
    %15 = arith.mulf %14, %8 : vector<16x128xf32>
    %cst_9 = arith.constant 1.000000e+00 : f32
    %16 = vector.broadcast %cst_9 : f32 to vector<16x128xf32>
    %17 = arith.addf %16, %15 : vector<16x128xf32>
    %18 = arith.mulf %12, %17 : vector<16x128xf32>
    %19 = math.tanh %18 : vector<16x128xf32>
    %cst_10 = arith.constant 1.000000e+00 : f32
    %20 = vector.broadcast %cst_10 : f32 to vector<16x128xf32>
    %21 = arith.addf %20, %19 : vector<16x128xf32>
    %22 = arith.mulf %10, %21 : vector<16x128xf32>
    %c0_11 = arith.constant 0 : index
    %c0_12 = arith.constant 0 : index
    %23 = vector.load %arg7[%c0_11, %c0_12] : memref<16x128xf32, #tpu.memory_space<vmem>>, vector<16x128xf32>
    %c0_13 = arith.constant 0 : index
    %c0_14 = arith.constant 0 : index
    %24 = vector.load %arg5[%c0_13, %c0_14] : memref<128x128xf32, #tpu.memory_space<vmem>>, vector<128x128xf32>
    %cst_15 = arith.constant dense<0.000000e+00> : vector<16x128xf32>
    %25 = tpu.matmul %22, %24, %cst_15 {dimension_numbers = #tpu.dot_dimension_numbers<[1], [0], [0], [1], [0, 0, 1, 1], [], []>} : vector<16x128xf32>, vector<128x128xf32>, vector<16x128xf32> -> vector<16x128xf32>
    %26 = arith.addf %23, %25 : vector<16x128xf32>
    %c0_16 = arith.constant 0 : index
    %c0_17 = arith.constant 0 : index
    %27 = vector.load %arg7[%c0_16, %c0_17] : memref<16x128xf32, #tpu.memory_space<vmem>>, vector<16x128xf32>
    tpu.vector_store %arg7[%c0_16, %c0_17], %26 {strides = array<i32>} : memref<16x128xf32, #tpu.memory_space<vmem>>, vector<16x128xf32>,
    %c0_i32_18 = arith.constant 0 : i32
    %28 = arith.cmpi eq, %arg1, %c0_i32_18 : i32
    %29 = arith.extui %28 : i1 to i32
    %c0_i32_19 = arith.constant 0 : i32
    %30 = arith.cmpi ne, %29, %c0_i32_19 : i32
    scf.if %30 {
      %c0_20 = arith.constant 0 : index
      %c0_21 = arith.constant 0 : index
      %31 = vector.load %arg7[%c0_20, %c0_21] : memref<16x128xf32, #tpu.memory_space<vmem>>, vector<16x128xf32>
      %c0_22 = arith.constant 0 : index
      %c0_23 = arith.constant 0 : index
      %32 = vector.load %arg6[%c0_22, %c0_23] : memref<1x128xf32, #tpu.memory_space<vmem>>, vector<1x128xf32>
      %33 = vector.broadcast %32 : vector<1x128xf32> to vector<16x128xf32>
      %34 = arith.addf %31, %33 : vector<16x128xf32>
      %c0_24 = arith.constant 0 : index
      %c0_25 = arith.constant 0 : index
      %35 = vector.load %arg7[%c0_24, %c0_25] : memref<16x128xf32, #tpu.memory_space<vmem>>, vector<16x128xf32>
      tpu.vector_store %arg7[%c0_24, %c0_25], %34 {strides = array<i32>} : memref<16x128xf32, #tpu.memory_space<vmem>>, vector<16x128xf32>,
    } else {
    }
    return
  }
  func.func @transform_0(%arg0: i32, %arg1: i32) -> (i32, i32) {
    %c0_i32 = arith.constant 0 : i32
    %c0_i32_0 = arith.constant 0 : i32
    return %arg0, %c0_i32 : i32, i32
  }
  func.func @transform_1(%arg0: i32, %arg1: i32) -> (i32, i32) {
    %c0_i32 = arith.constant 0 : i32
    %c0_i32_0 = arith.constant 0 : i32
    return %c0_i32, %arg1 : i32, i32
  }
  func.func @transform_2(%arg0: i32, %arg1: i32) -> (i32, i32) {
    %c0_i32 = arith.constant 0 : i32
    %c0_i32_0 = arith.constant 0 : i32
    return %c0_i32, %arg1 : i32, i32
  }
  func.func @transform_3(%arg0: i32, %arg1: i32) -> (i32, i32) {
    %c0_i32 = arith.constant 0 : i32
    %c0_i32_0 = arith.constant 0 : i32
    return %arg1, %c0_i32 : i32, i32
  }
  func.func @transform_4(%arg0: i32, %arg1: i32) -> (i32, i32) {
    %c0_i32 = arith.constant 0 : i32
    %c0_i32_0 = arith.constant 0 : i32
    %c0_i32_1 = arith.constant 0 : i32
    return %c0_i32, %c0_i32_0 : i32, i32
  }
  func.func @transform_5(%arg0: i32, %arg1: i32) -> (i32, i32) {
    %c0_i32 = arith.constant 0 : i32
    %c0_i32_0 = arith.constant 0 : i32
    return %arg0, %c0_i32 : i32, i32
  }
}

</mosaic_0001>

<llo_original>
// kernel: tpu_custom_call.1
$region0: #{tpu_custom_call.1}
  #allocation0 [shape = 'u32[]', space=smem, size = 0x4, offset = 0x4, fixed_abs, tag = 'smem constant byte address 0x4 - core index']
  #allocation1 [shape = 'u32[144,128]{1,0:T(1,128)}', space=vmem, size = 0x12000, scoped, tag = 'internal scratch']
  %s0 = inlined_call_operand.hbm [shape: f32[16,128], index: 0, kind: input, shape index: {}]
  %s1 = inlined_call_operand.hbm [shape: f32[128,128], index: 1, kind: input, shape index: {}]
  %s2 = inlined_call_operand.vmem [shape: f32[1,128], index: 2, kind: input, shape index: {}]
  %s3 = inlined_call_operand.hbm [shape: f32[128,128], index: 3, kind: input, shape index: {}]
  %s4 = inlined_call_operand.vmem [shape: f32[1,128], index: 4, kind: input, shape index: {}]
  %s5 = inlined_call_operand.hbm [shape: f32[16,128], index: 5, kind: output, shape index: {}]
  %s6 = sld [smem:[#allocation0]]
  $region50: #{tpu_custom_call.1} parent=0
    _
  %s8 = ssub.s32 1, %s6
  %s9 = scalar_select 0, %s8, %s6
  $region1: #{tpu_custom_call.1} parent=0
    #allocation2 [shape = 'u8[8192]{0}', space=vmem, size = 0x2000, scoped, tag = 'input window, operand 0, single buffered']
    #allocation3 [shape = 's32[1]{0}', space=sflag, size = 0x4, scoped, tag = 'scoped memory for tpu_custom_call.1']
    #allocation4 [shape = 's32[1]{0}', space=sflag, size = 0x4, scoped, tag = 'scoped memory for tpu_custom_call.1']
    #allocation5 [shape = 'u8[65536]{0}', space=vmem, size = 0x10000, scoped, tag = 'input window, operand 1, single buffered']
    #allocation6 [shape = 's32[1]{0}', space=sflag, size = 0x4, scoped, tag = 'scoped memory for tpu_custom_call.1']
    #allocation7 [shape = 'u8[65536]{0}', space=vmem, size = 0x10000, scoped, tag = 'input window, operand 3, single buffered']
    #allocation8 [shape = 'u8[8192]{0}', space=vmem, size = 0x2000, scoped, tag = 'output window, operand 0, single buffered']
    %10 = vsyncpa [#allocation3], 0
    %11 = vsyncpa [#allocation6], 0
    %12 = vsyncpa [#allocation4], 0
    // Predicated region
    $region2: #{tpu_custom_call.1} parent=1 // pred_check
      _
    $region3: #{tpu_custom_call.1} parent=1 // pred_check_branch
      %14 = sbr.rel (0) target = $region5
    $region4: #{tpu_custom_call.1} parent=1 // pred_region
      %s16 = ssub.s32 256, 256
      %17 = vsyncadd [#allocation3], %s16
      %s18 = sshll.u32 [#allocation2], 4
      %s19 = int_to_ptr.vmem [resolvable:$true] %s18
      %24 = dma.hbm_to_vmem [thread:$0]  %s0, 256, %s19, [#allocation3], 128, 128, 8
    $region5: #{tpu_custom_call.1} parent=1 // pred_fallthru
      _
    // Predicated region
    $region6: #{tpu_custom_call.1} parent=1 // pred_check
      _
    $region7: #{tpu_custom_call.1} parent=1 // pred_check_branch
      %26 = sbr.rel (0) target = $region9
    $region8: #{tpu_custom_call.1} parent=1 // pred_region
      %s28 = ssub.s32 2048, 2048
      %29 = vsyncadd [#allocation6], %s28
      %s30 = sshll.u32 [#allocation5], 4
      %s31 = int_to_ptr.vmem [resolvable:$true] %s30
      %36 = dma.hbm_to_vmem [thread:$0]  %s1, 2048, %s31, [#allocation6], 128, 128, 8
    $region9: #{tpu_custom_call.1} parent=1 // pred_fallthru
      _
    // Predicated region
    $region10: #{tpu_custom_call.1} parent=1 // pred_check
      _
    $region11: #{tpu_custom_call.1} parent=1 // pred_check_branch
      %38 = sbr.rel (0) target = $region13
    $region12: #{tpu_custom_call.1} parent=1 // pred_region
      _
    $region13: #{tpu_custom_call.1} parent=1 // pred_fallthru
      _
    // Predicated region
    $region14: #{tpu_custom_call.1} parent=1 // pred_check
      _
    $region15: #{tpu_custom_call.1} parent=1 // pred_check_branch
      %40 = sbr.rel (0) target = $region17
    $region16: #{tpu_custom_call.1} parent=1 // pred_region
      %s42 = ssub.s32 2048, 2048
      %43 = vsyncadd [#allocation6], %s42
      %s44 = sshll.u32 [#allocation7], 4
      %s45 = int_to_ptr.vmem [resolvable:$true] %s44
      %50 = dma.hbm_to_vmem [thread:$0]  %s3, 2048, %s45, [#allocation6], 128, 128, 8
    $region17: #{tpu_custom_call.1} parent=1 // pred_fallthru
      _
    // Predicated region
    $region18: #{tpu_custom_call.1} parent=1 // pred_check
      _
    $region19: #{tpu_custom_call.1} parent=1 // pred_check_branch
      %52 = sbr.rel (0) target = $region21
    $region20: #{tpu_custom_call.1} parent=1 // pred_region
      _
    $region21: #{tpu_custom_call.1} parent=1 // pred_fallthru
      _
    // Predicated region
    $region22: #{tpu_custom_call.1} parent=1 // pred_check
      _
    $region23: #{tpu_custom_call.1} parent=1 // pred_check_branch
      %54 = sbr.rel (0) target = $region25
    $region24: #{tpu_custom_call.1} parent=1 // pred_region
      %55 = dma.done [#allocation3], 256
    $region25: #{tpu_custom_call.1} parent=1 // pred_fallthru
      _
    // Predicated region
    $region26: #{tpu_custom_call.1} parent=1 // pred_check
      _
    $region27: #{tpu_custom_call.1} parent=1 // pred_check_branch
      %57 = sbr.rel (0) target = $region29
    $region28: #{tpu_custom_call.1} parent=1 // pred_region
      %58 = dma.done [#allocation6], 2048
    $region29: #{tpu_custom_call.1} parent=1 // pred_fallthru
      _
    // Predicated region
    $region30: #{tpu_custom_call.1} parent=1 // pred_check
      _
    $region31: #{tpu_custom_call.1} parent=1 // pred_check_branch
      %60 = sbr.rel (0) target = $region33
    $region32: #{tpu_custom_call.1} parent=1 // pred_region
      %61 = dma.done [#allocation6], 2048
    $region33: #{tpu_custom_call.1} parent=1 // pred_fallthru
      _
    %p62 = scmp.eq.s32.totalorder 0, 0
    // Predicated region
    $region34: #{tpu_custom_call.1} parent=1 // pred_check
      %p63 = pneg %p62
    $region35: #{tpu_custom_call.1} parent=1 // pred_check_branch
      %65 = sbr.rel (%p63) target = $region37
    $region36: #{tpu_custom_call.1} parent=1 // pred_region
      %66 = vst [vmem:[#allocation8] sm:$0xff] 0.0
      %67 = vst [vmem:[#allocation8 + $0x8] sm:$0xff] 0.0
    $region37: #{tpu_custom_call.1} parent=1 // pred_fallthru
      _
    %v68 = vld [vmem:[#allocation2] sm:$0xff]
    %v69 = vld [vmem:[#allocation2 + $0x8] sm:$0xff]
    %v70 = vld [vmem:[#allocation5] sm:$0xff]
    %v71 = vld [vmem:[#allocation5 + $0x8] sm:$0xff]
    %v72 = vld [vmem:[#allocation5 + $0x10] sm:$0xff]
    %v73 = vld [vmem:[#allocation5 + $0x18] sm:$0xff]
    %v74 = vld [vmem:[#allocation5 + $0x20] sm:$0xff]
    %v75 = vld [vmem:[#allocation5 + $0x28] sm:$0xff]
    %v76 = vld [vmem:[#allocation5 + $0x30] sm:$0xff]
    %v77 = vld [vmem:[#allocation5 + $0x38] sm:$0xff]
    %v78 = vld [vmem:[#allocation5 + $0x40] sm:$0xff]
    %v79 = vld [vmem:[#allocation5 + $0x48] sm:$0xff]
    %v80 = vld [vmem:[#allocation5 + $0x50] sm:$0xff]
    %v81 = vld [vmem:[#allocation5 + $0x58] sm:$0xff]
    %v82 = vld [vmem:[#allocation5 + $0x60] sm:$0xff]
    %v83 = vld [vmem:[#allocation5 + $0x68] sm:$0xff]
    %v84 = vld [vmem:[#allocation5 + $0x70] sm:$0xff]
    %v85 = vld [vmem:[#allocation5 + $0x78] sm:$0xff]
    %v86 = vld [vmem:[%s2] sm:$0x1]
    %v88 = vlaneseq
    %v89 = vshrl.u32 %v88, 7
    %v90 = vsub.s32 0, %v89
    %v91 = vrot.slane %v86, %v90
    %93 = vmatprep.subr.mxu0 0.0
    %94 = vmatpush1.msra.mxu0 %v70
    %95 = vmatprep.subr.mxu0 0.0
    %96 = vmatpush1.msra.mxu0 %v71
    %97 = vmatprep.subr.mxu0 0.0
    %98 = vmatpush1.msra.mxu0 %v72
    %99 = vmatprep.subr.mxu0 0.0
    %100 = vmatpush1.msra.mxu0 %v73
    %101 = vmatprep.subr.mxu0 0.0
    %102 = vmatpush1.msra.mxu0 %v74
    %103 = vmatprep.subr.mxu0 0.0
    %104 = vmatpush1.msra.mxu0 %v75
    %105 = vmatprep.subr.mxu0 0.0
    %106 = vmatpush1.msra.mxu0 %v76
    %107 = vmatprep.subr.mxu0 0.0
    %108 = vmatpush1.msra.mxu0 %v77
    %109 = vmatprep.subr.mxu0 0.0
    %110 = vmatpush1.msra.mxu0 %v78
    %111 = vmatprep.subr.mxu0 0.0
    %112 = vmatpush1.msra.mxu0 %v79
    %113 = vmatprep.subr.mxu0 0.0
    %114 = vmatpush1.msra.mxu0 %v80
    %115 = vmatprep.subr.mxu0 0.0
    %116 = vmatpush1.msra.mxu0 %v81
    %117 = vmatprep.subr.mxu0 0.0
    %118 = vmatpush1.msra.mxu0 %v82
    %119 = vmatprep.subr.mxu0 0.0
    %120 = vmatpush1.msra.mxu0 %v83
    %121 = vmatprep.subr.mxu0 0.0
    %122 = vmatpush1.msra.mxu0 %v84
    %123 = vmatprep.subr.mxu0 0.0
    %124 = vmatpush1.msra.mxu0 %v85
    %125 = vmatprep.subr.mxu0 0.0
    %126 = vmatpush1.msra.mxu0 0.0
    %127 = vmatprep.subr.mxu0 0.0
    %128 = vmatpush1.msra.mxu0 0.0
    %129 = vmatprep.subr.mxu0 0.0
    %130 = vmatpush1.msra.mxu0 0.0
    %131 = vmatprep.subr.mxu0 0.0
    %132 = vmatpush1.msra.mxu0 0.0
    %133 = vmatprep.subr.mxu0 0.0
    %134 = vmatpush1.msra.mxu0 0.0
    %135 = vmatprep.subr.mxu0 0.0
    %136 = vmatpush1.msra.mxu0 0.0
    %137 = vmatprep.subr.mxu0 0.0
    %138 = vmatpush1.msra.mxu0 0.0
    %139 = vmatprep.subr.mxu0 0.0
    %140 = vmatpush1.msra.mxu0 0.0
    %141 = vmatprep.subr.mxu0 0.0
    %142 = vmatpush1.msra.mxu0 0.0
    %143 = vmatprep.subr.mxu0 0.0
    %144 = vmatpush1.msra.mxu0 0.0
    %145 = vmatprep.subr.mxu0 0.0
    %146 = vmatpush1.msra.mxu0 0.0
    %147 = vmatprep.subr.mxu0 0.0
    %148 = vmatpush1.msra.mxu0 0.0
    %149 = vmatprep.subr.mxu0 0.0
    %150 = vmatpush1.msra.mxu0 0.0
    %151 = vmatprep.subr.mxu0 0.0
    %152 = vmatpush1.msra.mxu0 0.0
    %153 = vmatprep.subr.mxu0 0.0
    %154 = vmatpush1.msra.mxu0 0.0
    %155 = vmatprep.subr.mxu0 0.0
    %156 = vmatpush1.msra.mxu0 0.0
    %157 = vmatprep.mubr.f32.mxu0 0.0
    %158 = vmatmul.mubr.f32.gmra.mrb[0].mxu0 %v68
    %v159 = vpop.f32.mrb[0].mxu0
    %v160 = vadd.f32 %v91, %v159
    %v161 = vpop.f32.mrb[0].mxu0
    %162 = vmatprep.mubr.f32.mxu0 0.0
    %163 = vmatmul.mubr.f32.gmra.mrb[0].mxu0 %v69
    %v164 = vpop.f32.mrb[0].mxu0
    %v165 = vadd.f32 %v91, %v164
    %v166 = vpop.f32.mrb[0].mxu0
    %167 = vdwg.mxu0
    %v168 = vmul.f32 %v160, 0.5
    %v169 = vmul.f32 %v165, 0.5
    %v170 = vmul.f32 %v160, 0.7978846
    %v171 = vmul.f32 %v165, 0.7978846
    %v172 = vmul.f32 %v160, 0.044715
    %v173 = vmul.f32 %v165, 0.044715
    %v174 = vmul.f32 %v172, %v160
    %v175 = vmul.f32 %v173, %v165
    %v176 = vadd.f32 %v174, 1.0
    %v177 = vadd.f32 %v175, 1.0
    %v178 = vmul.f32 %v170, %v176
    %v179 = vmul.f32 %v171, %v177
    %v180 = vtanh.pop %v178
    %v181 = vtanh.pop %v179
    %v182 = vadd.f32 %v180, 1.0
    %v183 = vadd.f32 %v181, 1.0
    %v184 = vmul.f32 %v168, %v182
    %v185 = vmul.f32 %v169, %v183
    %v186 = vld [vmem:[#allocation8] sm:$0xff]
    %v187 = vld [vmem:[#allocation8 + $0x8] sm:$0xff]
    %v188 = vld [vmem:[#allocation7] sm:$0xff]
    %v189 = vld [vmem:[#allocation7 + $0x8] sm:$0xff]
    %v190 = vld [vmem:[#allocation7 + $0x10] sm:$0xff]
    %v191 = vld [vmem:[#allocation7 + $0x18] sm:$0xff]
    %v192 = vld [vmem:[#allocation7 + $0x20] sm:$0xff]
    %v193 = vld [vmem:[#allocation7 + $0x28] sm:$0xff]
    %v194 = vld [vmem:[#allocation7 + $0x30] sm:$0xff]
    %v195 = vld [vmem:[#allocation7 + $0x38] sm:$0xff]
    %v196 = vld [vmem:[#allocation7 + $0x40] sm:$0xff]
    %v197 = vld [vmem:[#allocation7 + $0x48] sm:$0xff]
    %v198 = vld [vmem:[#allocation7 + $0x50] sm:$0xff]
    %v199 = vld [vmem:[#allocation7 + $0x58] sm:$0xff]
    %v200 = vld [vmem:[#allocation7 + $0x60] sm:$0xff]
    %v201 = vld [vmem:[#allocation7 + $0x68] sm:$0xff]
    %v202 = vld [vmem:[#allocation7 + $0x70] sm:$0xff]
    %v203 = vld [vmem:[#allocation7 + $0x78] sm:$0xff]
    %204 = vmatprep.subr.mxu0 0.0
    %205 = vmatpush1.msra.mxu0 %v188
    %206 = vmatprep.subr.mxu0 0.0
    %207 = vmatpush1.msra.mxu0 %v189
    %208 = vmatprep.subr.mxu0 0.0
    %209 = vmatpush1.msra.mxu0 %v190
    %210 = vmatprep.subr.mxu0 0.0
    %211 = vmatpush1.msra.mxu0 %v191
    %212 = vmatprep.subr.mxu0 0.0
    %213 = vmatpush1.msra.mxu0 %v192
    %214 = vmatprep.subr.mxu0 0.0
    %215 = vmatpush1.msra.mxu0 %v193
    %216 = vmatprep.subr.mxu0 0.0
    %217 = vmatpush1.msra.mxu0 %v194
    %218 = vmatprep.subr.mxu0 0.0
    %219 = vmatpush1.msra.mxu0 %v195
    %220 = vmatprep.subr.mxu0 0.0
    %221 = vmatpush1.msra.mxu0 %v196
    %222 = vmatprep.subr.mxu0 0.0
    %223 = vmatpush1.msra.mxu0 %v197
    %224 = vmatprep.subr.mxu0 0.0
    %225 = vmatpush1.msra.mxu0 %v198
    %226 = vmatprep.subr.mxu0 0.0
    %227 = vmatpush1.msra.mxu0 %v199
    %228 = vmatprep.subr.mxu0 0.0
    %229 = vmatpush1.msra.mxu0 %v200
    %230 = vmatprep.subr.mxu0 0.0
    %231 = vmatpush1.msra.mxu0 %v201
    %232 = vmatprep.subr.mxu0 0.0
    %233 = vmatpush1.msra.mxu0 %v202
    %234 = vmatprep.subr.mxu0 0.0
    %235 = vmatpush1.msra.mxu0 %v203
    %236 = vmatprep.subr.mxu0 0.0
    %237 = vmatpush1.msra.mxu0 0.0
    %238 = vmatprep.subr.mxu0 0.0
    %239 = vmatpush1.msra.mxu0 0.0
    %240 = vmatprep.subr.mxu0 0.0
    %241 = vmatpush1.msra.mxu0 0.0
    %242 = vmatprep.subr.mxu0 0.0
    %243 = vmatpush1.msra.mxu0 0.0
    %244 = vmatprep.subr.mxu0 0.0
    %245 = vmatpush1.msra.mxu0 0.0
    %246 = vmatprep.subr.mxu0 0.0
    %247 = vmatpush1.msra.mxu0 0.0
    %248 = vmatprep.subr.mxu0 0.0
    %249 = vmatpush1.msra.mxu0 0.0
    %250 = vmatprep.subr.mxu0 0.0
    %251 = vmatpush1.msra.mxu0 0.0
    %252 = vmatprep.subr.mxu0 0.0
    %253 = vmatpush1.msra.mxu0 0.0
    %254 = vmatprep.subr.mxu0 0.0
    %255 = vmatpush1.msra.mxu0 0.0
    %256 = vmatprep.subr.mxu0 0.0
    %257 = vmatpush1.msra.mxu0 0.0
    %258 = vmatprep.subr.mxu0 0.0
    %259 = vmatpush1.msra.mxu0 0.0
    %260 = vmatprep.subr.mxu0 0.0
    %261 = vmatpush1.msra.mxu0 0.0
    %262 = vmatprep.subr.mxu0 0.0
    %263 = vmatpush1.msra.mxu0 0.0
    %264 = vmatprep.subr.mxu0 0.0
    %265 = vmatpush1.msra.mxu0 0.0
    %266 = vmatprep.subr.mxu0 0.0
    %267 = vmatpush1.msra.mxu0 0.0
    %268 = vmatprep.mubr.f32.mxu0 0.0
    %269 = vmatmul.mubr.f32.gmra.mrb[0].mxu0 %v184
    %v270 = vpop.f32.mrb[0].mxu0
    %v271 = vadd.f32 0.0, %v270
    %v272 = vpop.f32.mrb[0].mxu0
    %273 = vmatprep.mubr.f32.mxu0 0.0
    %274 = vmatmul.mubr.f32.gmra.mrb[0].mxu0 %v185
    %v275 = vpop.f32.mrb[0].mxu0
    %v276 = vadd.f32 0.0, %v275
    %v277 = vpop.f32.mrb[0].mxu0
    %278 = vdwg.mxu0
    %v279 = vadd.f32 %v186, %v271
    %v280 = vadd.f32 %v187, %v276
    %281 = vst [vmem:[#allocation8] sm:$0xff] %v279
    %282 = vst [vmem:[#allocation8 + $0x8] sm:$0xff] %v280
    // Predicated region
    $region38: #{tpu_custom_call.1} parent=1 // pred_check
      %p283 = pneg %p62
    $region39: #{tpu_custom_call.1} parent=1 // pred_check_branch
      %285 = sbr.rel (%p283) target = $region41
    $region40: #{tpu_custom_call.1} parent=1 // pred_region
      %v286 = vld [vmem:[#allocation8] sm:$0xff]
      %v287 = vld [vmem:[#allocation8 + $0x8] sm:$0xff]
      %v288 = vld [vmem:[%s4] sm:$0x1]
      %v290 = vlaneseq
      %v291 = vshrl.u32 %v290, 7
      %v292 = vsub.s32 0, %v291
      %v293 = vrot.slane %v288, %v292
      %v295 = vadd.f32 %v286, %v293
      %v296 = vadd.f32 %v287, %v293
      %297 = vst [vmem:[#allocation8] sm:$0xff] %v295
      %298 = vst [vmem:[#allocation8 + $0x8] sm:$0xff] %v296
    $region41: #{tpu_custom_call.1} parent=1 // pred_fallthru
      _
    // Predicated region
    $region42: #{tpu_custom_call.1} parent=1 // pred_check
      _
    $region43: #{tpu_custom_call.1} parent=1 // pred_check_branch
      %300 = sbr.rel (0) target = $region45
    $region44: #{tpu_custom_call.1} parent=1 // pred_region
      %s302 = ssub.s32 256, 256
      %303 = vsyncadd [#allocation4], %s302
      %s304 = sshll.u32 [#allocation8], 4
      %s305 = int_to_ptr.vmem [resolvable:$true] %s304
      %310 = dma.vmem_to_hbm [thread:$0]  %s305, 256, %s5, [#allocation4], 128, 128, 8
    $region45: #{tpu_custom_call.1} parent=1 // pred_fallthru
      _
    // Predicated region
    $region46: #{tpu_custom_call.1} parent=1 // pred_check
      _
    $region47: #{tpu_custom_call.1} parent=1 // pred_check_branch
      %312 = sbr.rel (0) target = $region49
    $region48: #{tpu_custom_call.1} parent=1 // pred_region
      %313 = dma.done [#allocation4], 256
    $region49: #{tpu_custom_call.1} parent=1 // pred_fallthru
      _
    %314 = vsyncpa [#allocation3], 1
    %315 = vsyncpa [#allocation6], 1
    %316 = vsyncpa [#allocation4], 1

</llo_original>
